<compile_context>
chip_gen: v5e
topology: v5e:2x2
jax: 0.10.0
libtpu: 0.0.40
codegen_flags: <defaults>
</compile_context>

<pallas_src>
import functools

import jax
import jax.numpy as jnp
from jax import lax
from jax.experimental import pallas as pl
from jax.experimental.pallas import tpu as pltpu


# ---------------------------------------------------------------------------
# small helpers
# ---------------------------------------------------------------------------
def _round_up(x, m):
    return ((x + m - 1) // m) * m


def _pad2d(a, rows, cols):
    pr, pc = rows - a.shape[0], cols - a.shape[1]
    if pr == 0 and pc == 0:
        return a
    return jnp.pad(a, ((0, pr), (0, pc)))


def _pad_row_vec(v, n_padded):
    n = v.shape[0]
    if n != n_padded:
        v = jnp.pad(v, (0, n_padded - n))
    return v.reshape(1, n_padded)


def _pick_tm(m):
    if m >= 512:
        return 256
    if m >= 128:
        return 128
    return _round_up(m, 8)


def _pick_tn(n_padded):
    # 256-wide output tiles fill the v6e/v7x MXU; keep >=2 grid points when
    # possible so both v7x TensorCores get work.
    return 256 if (n_padded % 256 == 0 and n_padded >= 512) else 128


# ---------------------------------------------------------------------------
# Kernel 1: bottleneck Linear  y = x @ W^T + b     (K fully resident, 2-D grid)
# ---------------------------------------------------------------------------
def _linear_kernel(x_ref, w_ref, b_ref, o_ref):
    # x_ref: (tm, Kp), w_ref: (tn, Kp)  -> contract on K (PyTorch Linear layout)
    acc = lax.dot_general(
        x_ref[...],
        w_ref[...],
        dimension_numbers=(((1,), (1,)), ((), ())),
        preferred_element_type=jnp.float32,
    )
    o_ref[...] = (acc + b_ref[...]).astype(o_ref.dtype)


def bottleneck_linear(x, w, b):
    """x: [M, K], w: [N, K] (PyTorch Linear weight), b: [N] -> [M, N]."""
    M, K = x.shape
    N = w.shape[0]

    Kp = _round_up(K, 128)
    tm = _pick_tm(M)
    Mp = _round_up(M, tm)
    Np = _round_up(N, 128)
    tn = _pick_tn(Np)

    xp = _pad2d(x, Mp, Kp)
    wp = _pad2d(w, Np, Kp)
    bp = _pad_row_vec(b, Np)

    grid = (Mp // tm, Np // tn)
    out = pl.pallas_call(
        _linear_kernel,
        out_shape=jax.ShapeDtypeStruct((Mp, Np), x.dtype),
        grid_spec=pltpu.PrefetchScalarGridSpec(
            num_scalar_prefetch=0,
            grid=grid,
            in_specs=[
                pl.BlockSpec((tm, Kp), lambda i, j: (i, 0)),
                pl.BlockSpec((tn, Kp), lambda i, j: (j, 0)),
                pl.BlockSpec((1, tn), lambda i, j: (0, j)),
            ],
            out_specs=pl.BlockSpec((tm, tn), lambda i, j: (i, j)),
        ),
        compiler_params=pltpu.CompilerParams(
            dimension_semantics=("parallel", "parallel"),
        ),
    )(xp, wp, bp)

    if Mp != M or Np != N:
        out = out[:M, :N]
    return out


# ---------------------------------------------------------------------------
# Kernel 2: fused Linear + BatchNorm1d (training-mode batch stats, affine)
#           whole batch resident; grid over N tiles only.
# ---------------------------------------------------------------------------
def _linear_bn_kernel(x_ref, w_ref, b_ref, g_ref, beta_ref, o_ref, *,
                      m_actual, eps):
    y = lax.dot_general(
        x_ref[...],
        w_ref[...],
        dimension_numbers=(((1,), (1,)), ((), ())),
        preferred_element_type=jnp.float32,
    ) + b_ref[...]
    mp = y.shape[0]
    valid = lax.broadcasted_iota(jnp.int32, (mp, 1), 0) < m_actual
    inv_m = 1.0 / float(m_actual)
    ym = jnp.where(valid, y, 0.0)
    mean = jnp.sum(ym, axis=0, keepdims=True) * inv_m
    d = jnp.where(valid, y - mean, 0.0)
    var = jnp.sum(d * d, axis=0, keepdims=True) * inv_m  # biased, like PyTorch fwd
    o_ref[...] = (
        (y - mean) * lax.rsqrt(var + eps) * g_ref[...] + beta_ref[...]
    ).astype(o_ref.dtype)


def bottleneck_linear_bn_fused(x, w, b, gamma, beta, *, eps=1e-5):
    M, K = x.shape
    N = w.shape[0]

    Kp = _round_up(K, 128)
    Mp = _round_up(M, 8)
    Np = _round_up(N, 128)
    tn = _pick_tn(Np)

    xp = _pad2d(x, Mp, Kp)
    wp = _pad2d(w, Np, Kp)
    bp = _pad_row_vec(b, Np)
    gp = _pad_row_vec(gamma, Np)
    betap = _pad_row_vec(beta, Np)

    kern = functools.partial(_linear_bn_kernel, m_actual=M, eps=eps)
    grid = (Np // tn,)
    out = pl.pallas_call(
        kern,
        out_shape=jax.ShapeDtypeStruct((Mp, Np), x.dtype),
        grid_spec=pltpu.PrefetchScalarGridSpec(
            num_scalar_prefetch=0,
            grid=grid,
            in_specs=[
                pl.BlockSpec((Mp, Kp), lambda j: (0, 0)),   # x resident across N tiles
                pl.BlockSpec((tn, Kp), lambda j: (j, 0)),
                pl.BlockSpec((1, tn), lambda j: (0, j)),
                pl.BlockSpec((1, tn), lambda j: (0, j)),
                pl.BlockSpec((1, tn), lambda j: (0, j)),
            ],
            out_specs=pl.BlockSpec((Mp, tn), lambda j: (0, j)),
        ),
        compiler_params=pltpu.CompilerParams(
            dimension_semantics=("parallel",),
        ),
    )(xp, wp, bp, gp, betap)

    if Mp != M or Np != N:
        out = out[:M, :N]
    return out


# ---------------------------------------------------------------------------
# Kernel 3: standalone BatchNorm1d fallback for batches too large to fuse
# ---------------------------------------------------------------------------
def _bn_kernel(y_ref, g_ref, beta_ref, o_ref, *, m_actual, eps):
    y = y_ref[...].astype(jnp.float32)
    mp = y.shape[0]
    valid = lax.broadcasted_iota(jnp.int32, (mp, 1), 0) < m_actual
    inv_m = 1.0 / float(m_actual)
    ym = jnp.where(valid, y, 0.0)
    mean = jnp.sum(ym, axis=0, keepdims=True) * inv_m
    d = jnp.where(valid, y - mean, 0.0)
    var = jnp.sum(d * d, axis=0, keepdims=True) * inv_m
    o_ref[...] = (
        (y - mean) * lax.rsqrt(var + eps) * g_ref[...] + beta_ref[...]
    ).astype(o_ref.dtype)


def batchnorm1d(y, gamma, beta, *, eps=1e-5):
    """y: [M, N]; per-feature batch statistics (PyTorch BatchNorm1d train fwd)."""
    M, N = y.shape
    Mp = _round_up(M, 8)
    Np = _round_up(N, 128)
    tn = _pick_tn(Np)

    yp = _pad2d(y, Mp, Np)
    gp = _pad_row_vec(gamma, Np)
    betap = _pad_row_vec(beta, Np)

    kern = functools.partial(_bn_kernel, m_actual=M, eps=eps)
    out = pl.pallas_call(
        kern,
        out_shape=jax.ShapeDtypeStruct((Mp, Np), y.dtype),
        grid_spec=pltpu.PrefetchScalarGridSpec(
            num_scalar_prefetch=0,
            grid=(Np // tn,),
            in_specs=[
                pl.BlockSpec((Mp, tn), lambda j: (0, j)),
                pl.BlockSpec((1, tn), lambda j: (0, j)),
                pl.BlockSpec((1, tn), lambda j: (0, j)),
            ],
            out_specs=pl.BlockSpec((Mp, tn), lambda j: (0, j)),
        ),
        compiler_params=pltpu.CompilerParams(
            dimension_semantics=("parallel",),
        ),
    )(yp, gp, betap)

    if Mp != M or Np != N:
        out = out[:M, :N]
    return out


# ---------------------------------------------------------------------------
# Module: feat_bottleneck
# ---------------------------------------------------------------------------
class FeatBottleneck:
    """JAX/Pallas port of feat_bottleneck.

    forward(x) = Linear(x);  if type=='bn': BatchNorm1d(Linear(x)).
    (relu / dropout exist in the PyTorch module but are never used in forward.)
    """

    # fuse Linear+BN only while the resident x block stays well under VMEM.
    _FUSE_VMEM_BUDGET = 8 << 20  # bytes for the resident x tile

    def __init__(self, feature_dim, bottleneck_dim=256, type="ori", key=None):
        if key is None:
            key = jax.random.PRNGKey(0)
        # xavier_normal_ (gain=1): std = sqrt(2 / (fan_in + fan_out))
        std = (2.0 / (feature_dim + bottleneck_dim)) ** 0.5
        self.w = std * jax.random.normal(
            key, (bottleneck_dim, feature_dim), dtype=jnp.float32
        )
        self.b = jnp.zeros((bottleneck_dim,), dtype=jnp.float32)
        # BatchNorm1d affine params (PyTorch defaults: weight=1, bias=0)
        self.gamma = jnp.ones((bottleneck_dim,), dtype=jnp.float32)
        self.beta = jnp.zeros((bottleneck_dim,), dtype=jnp.float32)
        self.type = type
        # TODO(synk): running_mean/running_var tracking (eval-mode BN) not implemented;
        # forward matches PyTorch training-mode BatchNorm1d batch statistics.

    def __call__(self, x):
        if self.type == "bn":
            M, K = x.shape
            Mp, Kp = _round_up(M, 8), _round_up(K, 128)
            if Mp * Kp * 4 <= self._FUSE_VMEM_BUDGET:
                return bottleneck_linear_bn_fused(
                    x, self.w, self.b, self.gamma, self.beta
                )
            y = bottleneck_linear(x, self.w, self.b)
            return batchnorm1d(y, self.gamma, self.beta)
        return bottleneck_linear(x, self.w, self.b)


if __name__ == "__main__":
    key = jax.random.PRNGKey(0)
    kx, kw = jax.random.split(key)

    batch = 8
    feature_dim = 128
    bottleneck_dim = 256

    x = jax.random.normal(kx, (batch, feature_dim), dtype=jnp.float32)

    # type='ori' path (default): just the bottleneck Linear
    mod_ori = FeatBottleneck(feature_dim, bottleneck_dim, type="ori", key=kw)
    y_ori = jax.block_until_ready(mod_ori(x))

    # type='bn' path: Linear -> BatchNorm1d (fused kernel at this size)
    mod_bn = FeatBottleneck(feature_dim, bottleneck_dim, type="bn", key=kw)
    y_bn = jax.block_until_ready(mod_bn(x))

    # also exercise the unfused BN fallback kernel for coverage
    y_lin = bottleneck_linear(x, mod_bn.w, mod_bn.b)
    y_bn2 = jax.block_until_ready(batchnorm1d(y_lin, mod_bn.gamma, mod_bn.beta))

    # reference checks in plain JAX
    ref_lin = x @ mod_ori.w.T + mod_ori.b
    assert jnp.allclose(y_ori, ref_lin, atol=1e-4, rtol=1e-4)

    mu = ref_lin.mean(axis=0, keepdims=True)
    var = ((ref_lin - mu) ** 2).mean(axis=0, keepdims=True)
    ref_bn = (ref_lin - mu) / jnp.sqrt(var + 1e-5) * mod_bn.gamma + mod_bn.beta
    assert jnp.allclose(y_bn, ref_bn, atol=1e-3, rtol=1e-3)
    assert jnp.allclose(y_bn2, ref_bn, atol=1e-3, rtol=1e-3)

    # non-aligned shapes exercise the padding/masking path
    x_odd = jax.random.normal(kx, (5, 100), dtype=jnp.float32)
    mod_odd = FeatBottleneck(100, 200, type="bn", key=kw)
    y_odd = jax.block_until_ready(mod_odd(x_odd))
    ref_odd_lin = x_odd @ mod_odd.w.T + mod_odd.b
    mu_o = ref_odd_lin.mean(axis=0, keepdims=True)
    var_o = ((ref_odd_lin - mu_o) ** 2).mean(axis=0, keepdims=True)
    ref_odd = (ref_odd_lin - mu_o) / jnp.sqrt(var_o + 1e-5) * mod_odd.gamma + mod_odd.beta
    assert jnp.allclose(y_odd, ref_odd, atol=1e-3, rtol=1e-3)

    print("KERNEL_OK")
</pallas_src>

<mosaic_0001>
module attributes {stable_mosaic.version = 11 : i64} {
  func.func @_linear_kernel(%arg0: i32, %arg1: i32, %arg2: memref<8x128xf32, #tpu.memory_space<vmem>>, %arg3: memref<128x128xf32, #tpu.memory_space<vmem>>, %arg4: memref<1x128xf32, #tpu.memory_space<vmem>>, %arg5: memref<8x128xf32, #tpu.memory_space<vmem>>) attributes {dimension_semantics = [#tpu.dimension_semantics<parallel>, #tpu.dimension_semantics<parallel>], iteration_bounds = array<i64: 1, 2>, scalar_prefetch = 0 : i64, scratch_operands = 0 : i64, tpu.core_type = #tpu.core_type<tc>, window_params = [{transform_indices = @transform_0, window_bounds = array<i64: 8, 128>}, {transform_indices = @transform_1, window_bounds = array<i64: 128, 128>}, {transform_indices = @transform_2, window_bounds = array<i64: 1, 128>}, {transform_indices = @transform_3, window_bounds = array<i64: 8, 128>}]} {
    %c0 = arith.constant 0 : index
    %c0_0 = arith.constant 0 : index
    %0 = vector.load %arg2[%c0, %c0_0] : memref<8x128xf32, #tpu.memory_space<vmem>>, vector<8x128xf32>
    %c0_1 = arith.constant 0 : index
    %c0_2 = arith.constant 0 : index
    %1 = vector.load %arg3[%c0_1, %c0_2] : memref<128x128xf32, #tpu.memory_space<vmem>>, vector<128x128xf32>
    %cst = arith.constant dense<0.000000e+00> : vector<8x128xf32>
    %2 = tpu.matmul %0, %1, %cst {dimension_numbers = #tpu.dot_dimension_numbers<[1], [1], [0], [0], [0, 0, 1, 0], [], []>} : vector<8x128xf32>, vector<128x128xf32>, vector<8x128xf32> -> vector<8x128xf32>
    %c0_3 = arith.constant 0 : index
    %c0_4 = arith.constant 0 : index
    %3 = vector.load %arg4[%c0_3, %c0_4] : memref<1x128xf32, #tpu.memory_space<vmem>>, vector<1x128xf32>
    %4 = vector.broadcast %3 : vector<1x128xf32> to vector<8x128xf32>
    %5 = arith.addf %2, %4 : vector<8x128xf32>
    %c0_5 = arith.constant 0 : index
    %c0_6 = arith.constant 0 : index
    %6 = vector.load %arg5[%c0_5, %c0_6] : memref<8x128xf32, #tpu.memory_space<vmem>>, vector<8x128xf32>
    tpu.vector_store %arg5[%c0_5, %c0_6], %5 {strides = array<i32>} : memref<8x128xf32, #tpu.memory_space<vmem>>, vector<8x128xf32>,
    return
  }
  func.func @transform_0(%arg0: i32, %arg1: i32) -> (i32, i32) {
    %c0_i32 = arith.constant 0 : i32
    %c0_i32_0 = arith.constant 0 : i32
    return %arg0, %c0_i32 : i32, i32
  }
  func.func @transform_1(%arg0: i32, %arg1: i32) -> (i32, i32) {
    %c0_i32 = arith.constant 0 : i32
    %c0_i32_0 = arith.constant 0 : i32
    return %arg1, %c0_i32 : i32, i32
  }
  func.func @transform_2(%arg0: i32, %arg1: i32) -> (i32, i32) {
    %c0_i32 = arith.constant 0 : i32
    %c0_i32_0 = arith.constant 0 : i32
    return %c0_i32, %arg1 : i32, i32
  }
  func.func @transform_3(%arg0: i32, %arg1: i32) -> (i32, i32) {
    %c0_i32 = arith.constant 0 : i32
    return %arg0, %arg1 : i32, i32
  }
}

</mosaic_0001>

<llo_original>
// kernel: tpu_custom_call.1
$region0: #{tpu_custom_call.1}
  #allocation0 [shape = 'u32[]', space=smem, size = 0x4, offset = 0x4, fixed_abs, tag = 'smem constant byte address 0x4 - core index']
  #allocation1 [shape = 'u32[72,128]{1,0:T(1,128)}', space=vmem, size = 0x9000, scoped, tag = 'internal scratch']
  %s0 = inlined_call_operand.hbm [shape: f32[8,128], index: 0, kind: input, shape index: {}]
  %s1 = inlined_call_operand.hbm [shape: f32[256,128], index: 1, kind: input, shape index: {}]
  %s2 = inlined_call_operand.hbm [shape: f32[1,256], index: 2, kind: input, shape index: {}]
  %s3 = inlined_call_operand.hbm [shape: f32[8,256], index: 3, kind: output, shape index: {}]
  %s4 = sld [smem:[#allocation0]]
  $region57: #{tpu_custom_call.1} parent=0
    _
  %s6 = ssub.s32 1, %s4
  %s7 = scalar_select 0, %s6, %s4
  $region1: #{tpu_custom_call.1} parent=0
    #allocation2 [shape = 'u8[4096]{0}', space=vmem, size = 0x1000, scoped, tag = 'input window, operand 0, single buffered']
    #allocation3 [shape = 's32[2]{0}', space=sflag, size = 0x8, scoped, tag = 'scoped memory for tpu_custom_call.1']
    #allocation4 [shape = 's32[2]{0}', space=sflag, size = 0x8, scoped, tag = 'scoped memory for tpu_custom_call.1']
    #allocation5 [shape = 'u8[131072]{0}', space=vmem, size = 0x20000, scoped, tag = 'input window, operand 1']
    #allocation6 [shape = 's32[2]{0}', space=sflag, size = 0x8, scoped, tag = 'scoped memory for tpu_custom_call.1']
    #allocation7 [shape = 'u8[1024]{0}', space=vmem, size = 0x400, scoped, tag = 'input window, operand 2']
    #allocation8 [shape = 'u8[8192]{0}', space=vmem, size = 0x2000, scoped, tag = 'output window, operand 0']
    %8 = vsyncpa [#allocation3], 0
    %9 = vsyncpa [#allocation6], 0
    %s10 = scalar_lea.sflag [#allocation6], 1
    %11 = vsyncpa %s10, 0
    %12 = vsyncpa [#allocation4], 0
    %s13 = scalar_lea.sflag [#allocation4], 1
    %14 = vsyncpa %s13, 0
    loop: start=0, step=1, limit=4
    $region2: #{tpu_custom_call.1} parent=1 // loop_pre_header
      _
    $region3: #{tpu_custom_call.1} parent=1 // loop_header
      %s16 = sphi 0, %s20
      %p17 = scmp.ge.s32.totalorder %s16, 4
      %s23 = sphi 0, %s35
      %s24 = sphi 0, %s31
      %s25 = sphi 0, %s23
      %s26 = sphi 0, %s24
      %s27 = sphi 0, %s25
      %s28 = sphi 0, %s26
      %s38 = sphi 0, %s40
      %s41 = sphi 0, %s38
      %s42 = sphi 0, %s41
      %s58 = sphi 0, %s42
      %s64 = sphi 0, %s66
      %s67 = sphi 0, %s64
      %s68 = sphi 0, %s67
      %s84 = sphi 0, %s68
      %s90 = sphi 0, %s92
      %s93 = sphi 0, %s90
      %s94 = sphi 0, %s93
      %s110 = sphi 0, %s94
      %s118 = sphi 0, %s120
      %s121 = sphi 0, %s118
      %s122 = sphi 0, %s121
      %s138 = sphi 0, %s122
    $region4: #{tpu_custom_call.1} parent=1 // loop_header_branch
      %19 = sbr.rel (%p17) target = $region8
    $region5: #{tpu_custom_call.1} parent=1 // loop_body
      %s21 = ssub.s32 %s16, 1
      %s22 = ssub.s32 %s16, 2
      %s29 = sadd.s32 1, %s24
      %p30 = scmp.ge.s32.totalorder %s29, 2
      %s31 = scalar_select %p30, 0, %s29
      %s32 = sadd.s32 1, %s23
      %s33 = scalar_select %p30, %s32, %s23
      %p34 = scmp.ge.s32.totalorder %s33, 1
      %s35 = scalar_select %p34, 0, %s33
      %s36 = ssub.s32 %s23, %s35
      %p37 = scmp.eq.s32.totalorder %s36, 0
      %s39 = sadd.s32 %s38, 1
      %s40 = scalar_select %p37, %s38, %s39
      %p43 = pneg %p37
      %p44 = scmp.eq.s32.totalorder %s16, 1
      %p45 = por %p43, %p44
      %p46 = scmp.ne.s32.totalorder %s38, %s41
      %p47 = scmp.eq.s32.totalorder %s16, 0
      %p48 = por %p46, %p47
      %p49 = scmp.ne.s32.totalorder %s38, %s41
      %p50 = scmp.eq.s32.totalorder %s21, 1
      %p51 = por %p49, %p50
      %p52 = scmp.ne.s32.totalorder %s41, %s42
      %p53 = scmp.eq.s32.totalorder %s21, 0
      %p54 = por %p52, %p53
      %p55 = scmp.ne.s32.totalorder %s41, %s42
      %p56 = scmp.eq.s32.totalorder %s22, 1
      %p57 = por %p55, %p56
      %p59 = scmp.ne.s32.totalorder %s42, %s58
      %p60 = scmp.eq.s32.totalorder %s22, 0
      %p61 = por %p59, %p60
      %s62 = ssub.s32 %s24, %s31
      %p63 = scmp.eq.s32.totalorder %s62, 0
      %s65 = sadd.s32 %s64, 1
      %s66 = scalar_select %p63, %s64, %s65
      %p69 = pneg %p63
      %p70 = scmp.eq.s32.totalorder %s16, 1
      %p71 = por %p69, %p70
      %p72 = scmp.ne.s32.totalorder %s64, %s67
      %p73 = scmp.eq.s32.totalorder %s16, 0
      %p74 = por %p72, %p73
      %p75 = scmp.ne.s32.totalorder %s64, %s67
      %p76 = scmp.eq.s32.totalorder %s21, 1
      %p77 = por %p75, %p76
      %p78 = scmp.ne.s32.totalorder %s67, %s68
      %p79 = scmp.eq.s32.totalorder %s21, 0
      %p80 = por %p78, %p79
      %p81 = scmp.ne.s32.totalorder %s67, %s68
      %p82 = scmp.eq.s32.totalorder %s22, 1
      %p83 = por %p81, %p82
      %p85 = scmp.ne.s32.totalorder %s68, %s84
      %p86 = scmp.eq.s32.totalorder %s22, 0
      %p87 = por %p85, %p86
      %s88 = ssub.s32 %s24, %s31
      %p89 = scmp.eq.s32.totalorder %s88, 0
      %s91 = sadd.s32 %s90, 1
      %s92 = scalar_select %p89, %s90, %s91
      %p95 = pneg %p89
      %p96 = scmp.eq.s32.totalorder %s16, 1
      %p97 = por %p95, %p96
      %p98 = scmp.ne.s32.totalorder %s90, %s93
      %p99 = scmp.eq.s32.totalorder %s16, 0
      %p100 = por %p98, %p99
      %p101 = scmp.ne.s32.totalorder %s90, %s93
      %p102 = scmp.eq.s32.totalorder %s21, 1
      %p103 = por %p101, %p102
      %p104 = scmp.ne.s32.totalorder %s93, %s94
      %p105 = scmp.eq.s32.totalorder %s21, 0
      %p106 = por %p104, %p105
      %p107 = scmp.ne.s32.totalorder %s93, %s94
      %p108 = scmp.eq.s32.totalorder %s22, 1
      %p109 = por %p107, %p108
      %p111 = scmp.ne.s32.totalorder %s94, %s110
      %p112 = scmp.eq.s32.totalorder %s22, 0
      %p113 = por %p111, %p112
      %s114 = ssub.s32 %s23, %s35
      %s115 = ssub.s32 %s24, %s31
      %s116 = sor.u32 %s114, %s115
      %p117 = scmp.eq.s32.totalorder %s116, 0
      %s119 = sadd.s32 %s118, 1
      %s120 = scalar_select %p117, %s118, %s119
      %p123 = pneg %p117
      %p124 = scmp.eq.s32.totalorder %s16, 1
      %p125 = por %p123, %p124
      %p126 = scmp.ne.s32.totalorder %s118, %s121
      %p127 = scmp.eq.s32.totalorder %s16, 0
      %p128 = por %p126, %p127
      %p129 = scmp.ne.s32.totalorder %s118, %s121
      %p130 = scmp.eq.s32.totalorder %s21, 1
      %p131 = por %p129, %p130
      %p132 = scmp.ne.s32.totalorder %s121, %s122
      %p133 = scmp.eq.s32.totalorder %s21, 0
      %p134 = por %p132, %p133
      %p135 = scmp.ne.s32.totalorder %s121, %s122
      %p136 = scmp.eq.s32.totalorder %s22, 1
      %p137 = por %p135, %p136
      %p139 = scmp.ne.s32.totalorder %s122, %s138
      %p140 = scmp.eq.s32.totalorder %s22, 0
      %p141 = por %p139, %p140
      %p142 = scmp.le.s32.totalorder 1, %s16
      %p143 = scmp.lt.s32.totalorder %s16, 3
      %p144 = pnand %p142, %p143
      %p145 = pneg %p144
      // Predicated region
      $region9: #{tpu_custom_call.1} parent=5 // pred_check
        _
      $region10: #{tpu_custom_call.1} parent=5 // pred_check_branch
        %147 = sbr.rel (%p144) target = $region12
      $region11: #{tpu_custom_call.1} parent=5 // pred_region
        %s148 = ssub.s32 %s16, 1
        // Predicated region
        $region13: #{tpu_custom_call.1} parent=11 // pred_check
          %p149 = pneg %p54
        $region14: #{tpu_custom_call.1} parent=11 // pred_check_branch
          %151 = sbr.rel (%p149) target = $region16
        $region15: #{tpu_custom_call.1} parent=11 // pred_region
          %153 = vsyncadd [#allocation3], 0
          %s154 = smul.addr %s25, 8
          %s155 = scalar_lea.hbm %s0, %s154
          %s157 = sshll.u32 %s155, 4
          %s158 = int_to_ptr.hbm [resolvable:$true] %s157
          %s159 = sshll.u32 [#allocation2], 4
          %s160 = int_to_ptr.vmem [resolvable:$true] %s159
          %162 = dma.hbm_to_vmem [thread:$0]  %s158, 128, %s160, [#allocation3]
        $region16: #{tpu_custom_call.1} parent=11 // pred_fallthru
          _
      $region12: #{tpu_custom_call.1} parent=5 // pred_fallthru
        _
      %p163 = scmp.lt.s32.totalorder %s16, 2
      // Predicated region
      $region17: #{tpu_custom_call.1} parent=5 // pred_check
        %p164 = pneg %p163
      $region18: #{tpu_custom_call.1} parent=5 // pred_check_branch
        %166 = sbr.rel (%p164) target = $region20
      $region19: #{tpu_custom_call.1} parent=5 // pred_region
        // Predicated region
        $region21: #{tpu_custom_call.1} parent=19 // pred_check
          %p167 = pneg %p74
        $region22: #{tpu_custom_call.1} parent=19 // pred_check_branch
          %169 = sbr.rel (%p167) target = $region24
        $region23: #{tpu_custom_call.1} parent=19 // pred_region
          %s170 = sand.u32 %s16, 1
          %s171 = scalar_lea.sflag [#allocation6], %s170
          %s172 = sand.u32 %s64, 1
          %s173 = smul.addr %s172, 128
          %s174 = scalar_lea.vmem [#allocation5], %s173
          %s175 = smul.u32 16, %s24
          %177 = vsyncadd %s171, 0
          %s178 = smul.addr %s175, 8
          %s179 = scalar_lea.hbm %s1, %s178
          %s180 = sshll.u32 %s179, 4
          %s181 = int_to_ptr.hbm [resolvable:$true] %s180
          %s182 = sshll.u32 %s174, 4
          %s183 = int_to_ptr.vmem [resolvable:$true] %s182
          %188 = dma.hbm_to_vmem [thread:$0]  %s181, 2048, %s183, %s171, 128, 128, 8
        $region24: #{tpu_custom_call.1} parent=19 // pred_fallthru
          _
        // Predicated region
        $region25: #{tpu_custom_call.1} parent=19 // pred_check
          %p189 = pneg %p100
        $region26: #{tpu_custom_call.1} parent=19 // pred_check_branch
          %191 = sbr.rel (%p189) target = $region28
        $region27: #{tpu_custom_call.1} parent=19 // pred_region
          %s192 = sand.u32 %s16, 1
          %s193 = scalar_lea.sflag [#allocation6], %s192
          %s194 = sand.u32 %s90, 1
          %s195 = scalar_lea.vmem [#allocation7], %s194
          %197 = vsyncadd %s193, 0
          %s198 = scalar_lea.hbm %s2, %s24
          %s200 = sshll.u32 %s198, 4
          %s201 = int_to_ptr.hbm [resolvable:$true] %s200
          %s202 = sshll.u32 %s195, 4
          %s203 = int_to_ptr.vmem [resolvable:$true] %s202
          %205 = dma.hbm_to_vmem [thread:$0]  %s201, 16, %s203, %s193
        $region28: #{tpu_custom_call.1} parent=19 // pred_fallthru
          _
      $region20: #{tpu_custom_call.1} parent=5 // pred_fallthru
        _
      %p206 = scmp.le.s32.totalorder 1, %s16
      %p207 = scmp.lt.s32.totalorder %s16, 3
      %p208 = pnand %p206, %p207
      %p209 = pneg %p208
      // Predicated region
      $region29: #{tpu_custom_call.1} parent=5 // pred_check
        _
      $region30: #{tpu_custom_call.1} parent=5 // pred_check_branch
        %211 = sbr.rel (%p208) target = $region32
      $region31: #{tpu_custom_call.1} parent=5 // pred_region
        %s212 = ssub.s32 %s16, 1
        // Predicated region
        $region33: #{tpu_custom_call.1} parent=31 // pred_check
          %p213 = pneg %p54
        $region34: #{tpu_custom_call.1} parent=31 // pred_check_branch
          %215 = sbr.rel (%p213) target = $region36
        $region35: #{tpu_custom_call.1} parent=31 // pred_region
          %217 = dma.done [#allocation3], 128
        $region36: #{tpu_custom_call.1} parent=31 // pred_fallthru
          _
        %s218 = sand.u32 %s21, 1
        %s219 = scalar_lea.sflag [#allocation6], %s218
        %s220 = sand.u32 %s67, 1
        %s221 = smul.addr %s220, 128
        %s222 = scalar_lea.vmem [#allocation5], %s221
        // Predicated region
        $region37: #{tpu_custom_call.1} parent=31 // pred_check
          %p223 = pneg %p80
        $region38: #{tpu_custom_call.1} parent=31 // pred_check_branch
          %225 = sbr.rel (%p223) target = $region40
        $region39: #{tpu_custom_call.1} parent=31 // pred_region
          %227 = dma.done %s219, 2048
        $region40: #{tpu_custom_call.1} parent=31 // pred_fallthru
          _
        %s228 = sand.u32 %s21, 1
        %s229 = scalar_lea.sflag [#allocation6], %s228
        %s230 = sand.u32 %s93, 1
        %s231 = scalar_lea.vmem [#allocation7], %s230
        // Predicated region
        $region41: #{tpu_custom_call.1} parent=31 // pred_check
          %p232 = pneg %p106
        $region42: #{tpu_custom_call.1} parent=31 // pred_check_branch
          %234 = sbr.rel (%p232) target = $region44
        $region43: #{tpu_custom_call.1} parent=31 // pred_region
          %236 = dma.done %s229, 16
        $region44: #{tpu_custom_call.1} parent=31 // pred_fallthru
          _
        %p237 = pneg %p54
        %p238 = pneg %p51
        %s239 = sand.u32 %s21, 1
        %s240 = scalar_lea.sflag [#allocation6], %s239
        %s241 = sand.u32 %s67, 1
        %s242 = smul.addr %s241, 128
        %s243 = scalar_lea.vmem [#allocation5], %s242
        %p244 = pneg %p80
        %p245 = pneg %p77
        %s246 = sand.u32 %s21, 1
        %s247 = scalar_lea.sflag [#allocation6], %s246
        %s248 = sand.u32 %s93, 1
        %s249 = scalar_lea.vmem [#allocation7], %s248
        %p250 = pneg %p106
        %p251 = pneg %p103
        %p252 = pneg %p134
        %p253 = pneg %p131
        %s254 = sand.u32 %s121, 1
        %s255 = scalar_lea.sflag [#allocation4], %s254
        %s256 = sand.u32 %s121, 1
        %s257 = smul.addr %s256, 8
        %s258 = scalar_lea.vmem [#allocation8], %s257
        %s259 = smul.u32 16, %s26
        %v260 = vld [vmem:[#allocation2] sm:$0xff]
        %v261 = vld [vmem:[%s222] sm:$0xff]
        %v262 = vld [vmem:[%s222 + $0x8] sm:$0xff]
        %v263 = vld [vmem:[%s222 + $0x10] sm:$0xff]
        %v264 = vld [vmem:[%s222 + $0x18] sm:$0xff]
        %v265 = vld [vmem:[%s222 + $0x20] sm:$0xff]
        %v266 = vld [vmem:[%s222 + $0x28] sm:$0xff]
        %v267 = vld [vmem:[%s222 + $0x30] sm:$0xff]
        %v268 = vld [vmem:[%s222 + $0x38] sm:$0xff]
        %v269 = vld [vmem:[%s222 + $0x40] sm:$0xff]
        %v270 = vld [vmem:[%s222 + $0x48] sm:$0xff]
        %v271 = vld [vmem:[%s222 + $0x50] sm:$0xff]
        %v272 = vld [vmem:[%s222 + $0x58] sm:$0xff]
        %v273 = vld [vmem:[%s222 + $0x60] sm:$0xff]
        %v274 = vld [vmem:[%s222 + $0x68] sm:$0xff]
        %v275 = vld [vmem:[%s222 + $0x70] sm:$0xff]
        %v276 = vld [vmem:[%s222 + $0x78] sm:$0xff]
        %v277 = vld [vmem:[%s231] sm:$0x1]
        %v279 = vperm.slane %v277, 0
        %281 = vmatpush.xpose.msra.mxu0 %v276
        %282 = vmatpush.xpose.msra.mxu0 %v275
        %283 = vmatpush.xpose.msra.mxu0 %v274
        %284 = vmatpush.xpose.msra.mxu0 %v273
        %285 = vmatpush.xpose.msra.mxu0 %v272
        %286 = vmatpush.xpose.msra.mxu0 %v271
        %287 = vmatpush.xpose.msra.mxu0 %v270
        %288 = vmatpush.xpose.msra.mxu0 %v269
        %289 = vmatpush.xpose.msra.mxu0 %v268
        %290 = vmatpush.xpose.msra.mxu0 %v267
        %291 = vmatpush.xpose.msra.mxu0 %v266
        %292 = vmatpush.xpose.msra.mxu0 %v265
        %293 = vmatpush.xpose.msra.mxu0 %v264
        %294 = vmatpush.xpose.msra.mxu0 %v263
        %295 = vmatpush.xpose.msra.mxu0 %v262
        %296 = vmatpush.xpose.msra.mxu0 %v261
        %297 = vmatmul.f32.gmra.mxu0 %v260
        %v298 = vpop.f32.mrf.mxu0
        %v299 = vadd.f32 %v279, %v298
        %300 = vdwg.mxu0
        %301 = vst [vmem:[%s258] sm:$0xff] %v299
        %s302 = sand.u32 %s121, 1
        %s303 = scalar_lea.sflag [#allocation4], %s302
        %s304 = sand.u32 %s121, 1
        %s305 = smul.addr %s304, 8
        %s306 = scalar_lea.vmem [#allocation8], %s305
        // Predicated region
        $region45: #{tpu_custom_call.1} parent=31 // pred_check
          %p307 = pneg %p131
        $region46: #{tpu_custom_call.1} parent=31 // pred_check_branch
          %309 = sbr.rel (%p307) target = $region48
        $region47: #{tpu_custom_call.1} parent=31 // pred_region
          %311 = vsyncadd %s303, 0
          %s312 = smul.addr %s25, 2
          %s313 = sadd.s32 %s26, %s312
          %s314 = smul.addr %s313, 8
          %s315 = scalar_lea.hbm %s3, %s314
          %s317 = sshll.u32 %s306, 4
          %s318 = int_to_ptr.vmem [resolvable:$true] %s317
          %s319 = sshll.u32 %s315, 4
          %s320 = int_to_ptr.hbm [resolvable:$true] %s319
          %322 = dma.vmem_to_hbm [thread:$0]  %s318, 128, %s320, %s303
        $region48: #{tpu_custom_call.1} parent=31 // pred_fallthru
          _
      $region32: #{tpu_custom_call.1} parent=5 // pred_fallthru
        _
      %p323 = scmp.le.s32.totalorder 2, %s16
      // Predicated region
      $region49: #{tpu_custom_call.1} parent=5 // pred_check
        %p324 = pneg %p323
      $region50: #{tpu_custom_call.1} parent=5 // pred_check_branch
        %326 = sbr.rel (%p324) target = $region52
      $region51: #{tpu_custom_call.1} parent=5 // pred_region
        %s327 = ssub.s32 %s16, 2
        // Predicated region
        $region53: #{tpu_custom_call.1} parent=51 // pred_check
          %p328 = pneg %p137
        $region54: #{tpu_custom_call.1} parent=51 // pred_check_branch
          %330 = sbr.rel (%p328) target = $region56
        $region55: #{tpu_custom_call.1} parent=51 // pred_region
          %s331 = sand.u32 %s122, 1
          %s332 = scalar_lea.sflag [#allocation4], %s331
          %s333 = sand.u32 %s122, 1
          %s334 = smul.addr %s333, 8
          %s335 = scalar_lea.vmem [#allocation8], %s334
          %337 = dma.done %s332, 128
        $region56: #{tpu_custom_call.1} parent=51 // pred_fallthru
          _
      $region52: #{tpu_custom_call.1} parent=5 // pred_fallthru
        _
    $region6: #{tpu_custom_call.1} parent=1 // loop_footer
      %s20 = sadd.s32 1, %s16
    $region7: #{tpu_custom_call.1} parent=1 // loop_footer_branch
      %15 = sbr.rel target = $region3
    $region8: #{tpu_custom_call.1} parent=1 // loop_exit
      _
    %338 = vsyncpa [#allocation3], 1
    %s339 = scalar_lea.sflag [#allocation3], 1
    %340 = vsyncpa %s339, 1
    %341 = vsyncpa [#allocation6], 1
    %s342 = scalar_lea.sflag [#allocation6], 1
    %343 = vsyncpa %s342, 1
    %344 = vsyncpa [#allocation4], 1
    %s345 = scalar_lea.sflag [#allocation4], 1
    %346 = vsyncpa %s345, 1

</llo_original>
